<compile_context>
chip_gen: v7x
topology: tpu7x:2x2x1
jax: 0.10.0
libtpu: 0.0.40
codegen_flags: <defaults>
</compile_context>

<pallas_src>
import functools

import jax
import jax.numpy as jnp
import numpy as np
from jax.experimental import pallas as pl
from jax.experimental.pallas import tpu as pltpu


@functools.lru_cache(maxsize=None)
def _interp_matrix_np(n_out: int, n_in: int) -> np.ndarray:
    """Bilinear interp matrix matching F.interpolate(align_corners=True)."""
    if n_out == 1:
        src = np.zeros((1,), dtype=np.float64)
    else:
        src = np.arange(n_out, dtype=np.float64) * (n_in - 1) / (n_out - 1)
    lo = np.clip(np.floor(src).astype(np.int64), 0, n_in - 1)
    hi = np.clip(lo + 1, 0, n_in - 1)
    frac = (src - lo).astype(np.float32)
    m = np.zeros((n_out, n_in), dtype=np.float32)
    rows = np.arange(n_out)
    m[rows, lo] += 1.0 - frac
    m[rows, hi] += frac
    return m  # (n_out, n_in)


def _pick_tile_h(H: int, bytes_per_out_row: int, budget_bytes: int = 4 << 20) -> int:
    """Largest row-tile (multiple of 8, dividing H) under a per-step byte budget,
    preferring >=2 tiles so the auto-pipeline can overlap DMA with compute."""
    cands = [d for d in range(8, H + 1, 8) if H % d == 0]
    if not cands:
        return H  # full-extent block is always legal
    good = [d for d in cands if d * bytes_per_out_row <= budget_bytes and H // d >= 2]
    if good:
        return max(good)
    small = [d for d in cands if d * bytes_per_out_row <= budget_bytes]
    if small:
        return max(small)
    return min(cands)


def _sam_fuse_kernel(low_ref, pred_ref, ah_ref, awT_ref, out_ref, lm_ref, *, alpha):
    # low_ref : (1, 1, hl, wl)   low-res SAM mask logits for this batch element
    # pred_ref: (1, 2, tH, W)    model logits row-tile (2 classes)
    # ah_ref  : (tH, hl)         row-interp matrix tile
    # awT_ref : (wl, W)          col-interp matrix (pre-transposed)
    # out_ref : (1, 2, tH, W)    fused prediction row-tile
    # lm_ref  : (1, 1, tH, W)    upsampled SAM logits ("low_masks") row-tile
    low = low_ref[0, 0].astype(jnp.float32)     # (hl, wl)
    ah = ah_ref[...]                            # (tH, hl)
    awT = awT_ref[...]                          # (wl, W)

    # Separable bilinear upsample (align_corners=True) as two MXU matmuls.
    up = jnp.dot(ah, low, preferred_element_type=jnp.float32)   # (tH, wl)
    up = jnp.dot(up, awT, preferred_element_type=jnp.float32)   # (tH, W)
    lm_ref[0, 0] = up.astype(lm_ref.dtype)

    # coff_fuse, simplified for 2 classes:
    #   softmax(pred)[1] == sigmoid(m1 - m0)  and  out0 == 1 - out1 (exact).
    sig = jax.nn.sigmoid(up)
    m0 = pred_ref[0, 0].astype(jnp.float32)
    m1 = pred_ref[0, 1].astype(jnp.float32)
    sm1 = jax.nn.sigmoid(m1 - m0)

    a = jnp.float32(alpha)
    out1 = a * sig + (1.0 - a) * sm1
    out_ref[0, 1] = out1.astype(out_ref.dtype)
    out_ref[0, 0] = (1.0 - out1).astype(out_ref.dtype)


def sam_pred_fuse(low_res_masks, prediction, alpha, *, tile_h=None):
    """forward_mask_decoder's bilinear upsample + coff_fuse of SAM_pred.forward.

    low_res_masks: (B, 1, hl, wl) f32/bf16 - SAM mask-decoder logits (synthetic)
    prediction   : (B, 2, H,  W)  f32/bf16 - model logits
    returns (pred, low_masks): ((B,2,H,W) prediction.dtype, (B,1,H,W) low_res_masks.dtype)
    """
    B, _, hl, wl = low_res_masks.shape
    Bp, C, H, W = prediction.shape
    assert Bp == B and C == 2

    in_sz = jnp.dtype(prediction.dtype).itemsize
    lm_in_sz = jnp.dtype(low_res_masks.dtype).itemsize
    out_sz = in_sz
    lm_sz = lm_in_sz

    # Bytes of pred-in + pred-out + lm-out per output row (drives row tiling).
    bytes_per_out_row = W * (2 * in_sz + 2 * out_sz + lm_sz)
    if tile_h is None:
        tile_h = _pick_tile_h(H, bytes_per_out_row)
    assert H % tile_h == 0 and (tile_h % 8 == 0 or tile_h == H), (H, tile_h)
    n_h = H // tile_h

    # Host-built, cached interpolation matrices (f32 for accuracy).
    ah = jnp.asarray(_interp_matrix_np(H, hl))        # (H, hl)
    awT = jnp.asarray(_interp_matrix_np(W, wl).T)     # (wl, W)

    # VMEM budget: ~double-buffered blocks + headroom (v7x has 64 MiB physical).
    per_step = (hl * wl * lm_in_sz
                + 2 * tile_h * W * in_sz            # pred in
                + tile_h * hl * 4 + wl * W * 4      # interp matrices
                + 2 * tile_h * W * out_sz           # pred out
                + tile_h * W * lm_sz)               # low_masks out
    vmem_limit = int(min(max(4 * per_step + (4 << 20), 32 << 20), 48 << 20))

    kernel = functools.partial(_sam_fuse_kernel, alpha=float(alpha))
    pred, low_masks = pl.pallas_call(
        kernel,
        out_shape=(
            jax.ShapeDtypeStruct((B, 2, H, W), prediction.dtype),
            jax.ShapeDtypeStruct((B, 1, H, W), low_res_masks.dtype),
        ),
        grid=(B, n_h),
        in_specs=[
            pl.BlockSpec((1, 1, hl, wl), lambda b, h: (b, 0, 0, 0)),
            pl.BlockSpec((1, 2, tile_h, W), lambda b, h: (b, 0, h, 0)),
            pl.BlockSpec((tile_h, hl), lambda b, h: (h, 0)),
            pl.BlockSpec((wl, W), lambda b, h: (0, 0)),
        ],
        out_specs=(
            pl.BlockSpec((1, 2, tile_h, W), lambda b, h: (b, 0, h, 0)),
            pl.BlockSpec((1, 1, tile_h, W), lambda b, h: (b, 0, h, 0)),
        ),
        compiler_params=pltpu.CompilerParams(
            dimension_semantics=("parallel", "parallel"),
            vmem_limit_bytes=vmem_limit,
        ),
    )(low_res_masks, prediction, ah, awT)
    return pred, low_masks


def _reference(low_res_masks, prediction, alpha):
    """Pure-JAX reference (bilinear upsample + coff_fuse), f32 math."""
    B, _, hl, wl = low_res_masks.shape
    _, _, H, W = prediction.shape
    ah = jnp.asarray(_interp_matrix_np(H, hl))
    aw = jnp.asarray(_interp_matrix_np(W, wl))
    lm = jnp.einsum("hi,bcij,wj->bchw", ah,
                    low_res_masks.astype(jnp.float32), aw)     # (B,1,H,W)
    sig = jax.nn.sigmoid(lm)
    sam = jnp.concatenate([1.0 - sig, sig], axis=1)             # (B,2,H,W)
    sm = jax.nn.softmax(prediction.astype(jnp.float32), axis=1)
    return alpha * sam + (1.0 - alpha) * sm, lm


if __name__ == "__main__":
    key = jax.random.PRNGKey(0)
    k1, k2 = jax.random.split(key)

    # Small stand-in for the module's (400, 400) output; W kept lane-dense
    # (multiple of 128) so stores are unmasked, H row-tiled so grid = (2, 2).
    B, hl, wl = 2, 16, 16
    H, W = 128, 128
    alpha = 0.4

    low_res_masks = jax.random.normal(k1, (B, 1, hl, wl), dtype=jnp.float32)
    prediction = jax.random.normal(k2, (B, 2, H, W), dtype=jnp.float32)

    pred, low_masks = sam_pred_fuse(low_res_masks, prediction, alpha, tile_h=64)
    jax.block_until_ready((pred, low_masks))

    ref_pred, ref_low = _reference(low_res_masks, prediction, alpha)
    np.testing.assert_allclose(np.asarray(low_masks), np.asarray(ref_low),
                               rtol=1e-5, atol=1e-5)
    np.testing.assert_allclose(np.asarray(pred), np.asarray(ref_pred),
                               rtol=1e-5, atol=1e-5)

    # bf16 I/O path (halves HBM traffic on the bandwidth-bound hot path);
    # math stays f32 in-kernel, so only quantization error vs the f32 ref.
    pred16, low16 = sam_pred_fuse(low_res_masks.astype(jnp.bfloat16),
                                  prediction.astype(jnp.bfloat16),
                                  alpha, tile_h=64)
    jax.block_until_ready((pred16, low16))
    np.testing.assert_allclose(np.asarray(pred16, dtype=np.float32),
                               np.asarray(ref_pred), atol=5e-2, rtol=0)
    np.testing.assert_allclose(np.asarray(low16, dtype=np.float32),
                               np.asarray(ref_low), atol=5e-2, rtol=0)

    print("KERNEL_OK")
</pallas_src>

<mosaic_0001>
module attributes {stable_mosaic.version = 11 : i64} {
  func.func @_sam_fuse_kernel(%arg0: i32, %arg1: i32, %arg2: memref<1x1x16x16xf32, #tpu.memory_space<vmem>>, %arg3: memref<1x2x64x128xf32, #tpu.memory_space<vmem>>, %arg4: memref<64x16xf32, #tpu.memory_space<vmem>>, %arg5: memref<16x128xf32, #tpu.memory_space<vmem>>, %arg6: memref<1x2x64x128xf32, #tpu.memory_space<vmem>>, %arg7: memref<1x1x64x128xf32, #tpu.memory_space<vmem>>) attributes {dimension_semantics = [#tpu.dimension_semantics<parallel>, #tpu.dimension_semantics<parallel>], iteration_bounds = array<i64: 2, 2>, scalar_prefetch = 0 : i64, scratch_operands = 0 : i64, tpu.core_type = #tpu.core_type<tc>, window_params = [{transform_indices = @transform_0, window_bounds = array<i64: 1, 1, 16, 16>}, {transform_indices = @transform_1, window_bounds = array<i64: 1, 2, 64, 128>}, {transform_indices = @transform_2, window_bounds = array<i64: 64, 16>}, {pipeline_mode = #tpu.pipeline_mode<synchronous>, transform_indices = @transform_3, window_bounds = array<i64: 16, 128>}, {transform_indices = @transform_4, window_bounds = array<i64: 1, 2, 64, 128>}, {transform_indices = @transform_5, window_bounds = array<i64: 1, 1, 64, 128>}]} {
    %c0 = arith.constant 0 : index
    %c0_0 = arith.constant 0 : index
    %c0_1 = arith.constant 0 : index
    %c0_2 = arith.constant 0 : index
    %0 = vector.load %arg2[%c0, %c0_0, %c0_1, %c0_2] : memref<1x1x16x16xf32, #tpu.memory_space<vmem>>, vector<1x1x16x16xf32>
    %1 = vector.shape_cast %0 : vector<1x1x16x16xf32> to vector<16x16xf32>
    %c0_3 = arith.constant 0 : index
    %c0_4 = arith.constant 0 : index
    %2 = vector.load %arg4[%c0_3, %c0_4] : memref<64x16xf32, #tpu.memory_space<vmem>>, vector<64x16xf32>
    %c0_5 = arith.constant 0 : index
    %c0_6 = arith.constant 0 : index
    %3 = vector.load %arg5[%c0_5, %c0_6] : memref<16x128xf32, #tpu.memory_space<vmem>>, vector<16x128xf32>
    %cst = arith.constant dense<0.000000e+00> : vector<64x16xf32>
    %4 = tpu.matmul %2, %1, %cst {dimension_numbers = #tpu.dot_dimension_numbers<[1], [0], [0], [1], [0, 0, 1, 1], [], []>} : vector<64x16xf32>, vector<16x16xf32>, vector<64x16xf32> -> vector<64x16xf32>
    %cst_7 = arith.constant dense<0.000000e+00> : vector<64x128xf32>
    %5 = tpu.matmul %4, %3, %cst_7 {dimension_numbers = #tpu.dot_dimension_numbers<[1], [0], [0], [1], [0, 0, 1, 1], [], []>} : vector<64x16xf32>, vector<16x128xf32>, vector<64x128xf32> -> vector<64x128xf32>
    %c0_8 = arith.constant 0 : index
    %c0_9 = arith.constant 0 : index
    %c0_10 = arith.constant 0 : index
    %c0_11 = arith.constant 0 : index
    %6 = vector.load %arg7[%c0_8, %c0_9, %c0_10, %c0_11] : memref<1x1x64x128xf32, #tpu.memory_space<vmem>>, vector<1x1x64x128xf32>
    %7 = vector.shape_cast %6 : vector<1x1x64x128xf32> to vector<64x128xf32>
    %8 = vector.shape_cast %5 : vector<64x128xf32> to vector<1x1x64x128xf32>
    tpu.vector_store %arg7[%c0_8, %c0_9, %c0_10, %c0_11], %8 {strides = array<i32>} : memref<1x1x64x128xf32, #tpu.memory_space<vmem>>, vector<1x1x64x128xf32>,
    %9 = arith.negf %5 : vector<64x128xf32>
    %10 = math.exp %9 : vector<64x128xf32>
    %cst_12 = arith.constant 1.000000e+00 : f32
    %11 = vector.broadcast %cst_12 : f32 to vector<64x128xf32>
    %12 = arith.addf %11, %10 : vector<64x128xf32>
    %13 = arith.divf %11, %12 : vector<64x128xf32>
    %c0_13 = arith.constant 0 : index
    %c0_14 = arith.constant 0 : index
    %c0_15 = arith.constant 0 : index
    %c0_16 = arith.constant 0 : index
    %14 = vector.load %arg3[%c0_13, %c0_14, %c0_15, %c0_16] : memref<1x2x64x128xf32, #tpu.memory_space<vmem>>, vector<1x1x64x128xf32>
    %15 = vector.shape_cast %14 : vector<1x1x64x128xf32> to vector<64x128xf32>
    %c0_17 = arith.constant 0 : index
    %c1 = arith.constant 1 : index
    %c0_18 = arith.constant 0 : index
    %c0_19 = arith.constant 0 : index
    %16 = vector.load %arg3[%c0_17, %c1, %c0_18, %c0_19] : memref<1x2x64x128xf32, #tpu.memory_space<vmem>>, vector<1x1x64x128xf32>
    %17 = vector.shape_cast %16 : vector<1x1x64x128xf32> to vector<64x128xf32>
    %18 = arith.subf %17, %15 : vector<64x128xf32>
    %19 = arith.negf %18 : vector<64x128xf32>
    %20 = math.exp %19 : vector<64x128xf32>
    %cst_20 = arith.constant 1.000000e+00 : f32
    %21 = vector.broadcast %cst_20 : f32 to vector<64x128xf32>
    %22 = arith.addf %21, %20 : vector<64x128xf32>
    %23 = arith.divf %21, %22 : vector<64x128xf32>
    %cst_21 = arith.constant 4.000000e-01 : f32
    %24 = vector.broadcast %cst_21 : f32 to vector<64x128xf32>
    %25 = arith.mulf %24, %13 : vector<64x128xf32>
    %cst_22 = arith.constant 1.000000e+00 : f32
    %cst_23 = arith.constant 4.000000e-01 : f32
    %26 = arith.subf %cst_22, %cst_23 : f32
    %27 = vector.broadcast %26 : f32 to vector<64x128xf32>
    %28 = arith.mulf %27, %23 : vector<64x128xf32>
    %29 = arith.addf %25, %28 : vector<64x128xf32>
    %c0_24 = arith.constant 0 : index
    %c1_25 = arith.constant 1 : index
    %c0_26 = arith.constant 0 : index
    %c0_27 = arith.constant 0 : index
    %30 = vector.load %arg6[%c0_24, %c1_25, %c0_26, %c0_27] : memref<1x2x64x128xf32, #tpu.memory_space<vmem>>, vector<1x1x64x128xf32>
    %31 = vector.shape_cast %30 : vector<1x1x64x128xf32> to vector<64x128xf32>
    %32 = vector.shape_cast %29 : vector<64x128xf32> to vector<1x1x64x128xf32>
    tpu.vector_store %arg6[%c0_24, %c1_25, %c0_26, %c0_27], %32 {strides = array<i32>} : memref<1x2x64x128xf32, #tpu.memory_space<vmem>>, vector<1x1x64x128xf32>,
    %cst_28 = arith.constant 1.000000e+00 : f32
    %33 = vector.broadcast %cst_28 : f32 to vector<64x128xf32>
    %34 = arith.subf %33, %29 : vector<64x128xf32>
    %c0_29 = arith.constant 0 : index
    %c0_30 = arith.constant 0 : index
    %c0_31 = arith.constant 0 : index
    %c0_32 = arith.constant 0 : index
    %35 = vector.load %arg6[%c0_29, %c0_30, %c0_31, %c0_32] : memref<1x2x64x128xf32, #tpu.memory_space<vmem>>, vector<1x1x64x128xf32>
    %36 = vector.shape_cast %35 : vector<1x1x64x128xf32> to vector<64x128xf32>
    %37 = vector.shape_cast %34 : vector<64x128xf32> to vector<1x1x64x128xf32>
    tpu.vector_store %arg6[%c0_29, %c0_30, %c0_31, %c0_32], %37 {strides = array<i32>} : memref<1x2x64x128xf32, #tpu.memory_space<vmem>>, vector<1x1x64x128xf32>,
    return
  }
  func.func @transform_0(%arg0: i32, %arg1: i32) -> (i32, i32, i32, i32) {
    %c0_i32 = arith.constant 0 : i32
    %c0_i32_0 = arith.constant 0 : i32
    %c0_i32_1 = arith.constant 0 : i32
    %c0_i32_2 = arith.constant 0 : i32
    return %arg0, %c0_i32, %c0_i32_0, %c0_i32_1 : i32, i32, i32, i32
  }
  func.func @transform_1(%arg0: i32, %arg1: i32) -> (i32, i32, i32, i32) {
    %c0_i32 = arith.constant 0 : i32
    %c0_i32_0 = arith.constant 0 : i32
    %c0_i32_1 = arith.constant 0 : i32
    return %arg0, %c0_i32, %arg1, %c0_i32_0 : i32, i32, i32, i32
  }
  func.func @transform_2(%arg0: i32, %arg1: i32) -> (i32, i32) {
    %c0_i32 = arith.constant 0 : i32
    %c0_i32_0 = arith.constant 0 : i32
    return %arg1, %c0_i32 : i32, i32
  }
  func.func @transform_3(%arg0: i32, %arg1: i32) -> (i32, i32) {
    %c0_i32 = arith.constant 0 : i32
    %c0_i32_0 = arith.constant 0 : i32
    %c0_i32_1 = arith.constant 0 : i32
    return %c0_i32, %c0_i32_0 : i32, i32
  }
  func.func @transform_4(%arg0: i32, %arg1: i32) -> (i32, i32, i32, i32) {
    %c0_i32 = arith.constant 0 : i32
    %c0_i32_0 = arith.constant 0 : i32
    %c0_i32_1 = arith.constant 0 : i32
    return %arg0, %c0_i32, %arg1, %c0_i32_0 : i32, i32, i32, i32
  }
  func.func @transform_5(%arg0: i32, %arg1: i32) -> (i32, i32, i32, i32) {
    %c0_i32 = arith.constant 0 : i32
    %c0_i32_0 = arith.constant 0 : i32
    %c0_i32_1 = arith.constant 0 : i32
    return %arg0, %c0_i32, %arg1, %c0_i32_0 : i32, i32, i32, i32
  }
}

</mosaic_0001>

<llo_original>
// kernel: tpu_custom_call.1
$region0: #{tpu_custom_call.1}
  #allocation0 [shape = 'u32[]', space=smem, size = 0x4, offset = 0x4, fixed_abs, tag = 'smem constant byte address 0x4 - core index']
  #allocation1 [shape = 'u32[144,128]{1,0:T(1,128)}', space=vmem, size = 0x12000, scoped, tag = 'internal scratch']
  #allocation8 [shape = 's32[]', space=sflag, size = 0x4, offset = 0, fixed_abs, tag = 'sflag constant byte address 0x0 - dummy sync flag']
  #allocation10 [shape = 's32[]', space=sflag, size = 0x4, offset = 0, fixed_abs, tag = 'sflag constant byte address 0x0 - dummy sync flag']
  %s0 = inlined_call_operand.vmem [shape: f32[2,1,16,16], index: 0, kind: input, shape index: {}]
  %s1 = inlined_call_operand.hbm [shape: f32[2,2,128,128], index: 1, kind: input, shape index: {}]
  %s2 = inlined_call_operand.vmem [shape: f32[128,16], index: 2, kind: input, shape index: {}]
  %s3 = inlined_call_operand.vmem [shape: f32[16,128], index: 3, kind: input, shape index: {}]
  %s4 = inlined_call_operand.hbm [shape: f32[2,2,128,128], index: 4, kind: output, shape index: {0}]
  %s5 = inlined_call_operand.hbm [shape: f32[2,1,128,128], index: 5, kind: output, shape index: {1}]
  %6 = xla_tuple %s4, %s5
  %s7 = sld [smem:[#allocation0]]
  $region61: #{tpu_custom_call.1} parent=0
    _
  %s9 = ssub.s32 1, %s7
  %s10 = scalar_select 0, %s9, %s7
  $region1: #{tpu_custom_call.1} parent=0
    #allocation2 [shape = 'u8[131072]{0}', space=vmem, size = 0x20000, scoped, tag = 'input window, operand 1']
    #allocation3 [shape = 's32[2]{0}', space=sflag, size = 0x8, scoped, tag = 'scoped memory for tpu_custom_call.1']
    #allocation4 [shape = 's32[2]{0}', space=sflag, size = 0x8, scoped, tag = 'scoped memory for tpu_custom_call.1']
    #allocation5 [shape = 'u8[131072]{0}', space=vmem, size = 0x20000, scoped, tag = 'output window, operand 0']
    #allocation6 [shape = 'u8[65536]{0}', space=vmem, size = 0x10000, scoped, tag = 'output window, operand 1']
    #allocation7 [shape = 's32[2]{0}', space=sflag, size = 0x8, scoped, tag = 'scoped memory for tpu_custom_call.1']
    %11 = vsyncpa [#allocation3], 0
    %s12 = scalar_lea.sflag [#allocation3], 1
    %13 = vsyncpa %s12, 0
    %14 = vsyncpa [#allocation4], 0
    %s15 = scalar_lea.sflag [#allocation4], 1
    %16 = vsyncpa %s15, 0
    %17 = vsyncpa [#allocation7], 0
    %s18 = scalar_lea.sflag [#allocation7], 1
    %19 = vsyncpa %s18, 0
    loop: start=0, step=1, limit=6
    $region2: #{tpu_custom_call.1} parent=1 // loop_pre_header
      _
    $region3: #{tpu_custom_call.1} parent=1 // loop_header
      %s21 = sphi 0, %s25
      %p22 = scmp.ge.s32.totalorder %s21, 6
      %s28 = sphi 0, %s40
      %s29 = sphi 0, %s36
      %s30 = sphi 0, %s28
      %s31 = sphi 0, %s29
      %s32 = sphi 0, %s30
      %s33 = sphi 0, %s31
      %s43 = sphi 0, %s45
      %s46 = sphi 0, %s43
      %s47 = sphi 0, %s46
      %s63 = sphi 0, %s47
      %s71 = sphi 0, %s73
      %s74 = sphi 0, %s71
      %s75 = sphi 0, %s74
      %s91 = sphi 0, %s75
      %s97 = sphi 0, %s99
      %s100 = sphi 0, %s97
      %s101 = sphi 0, %s100
      %s117 = sphi 0, %s101
      %s121 = sphi 0, %s121
      %s123 = sphi 0, %s121
      %s124 = sphi 0, %s123
      %s138 = sphi 0, %s124
      %s146 = sphi 0, %s148
      %s149 = sphi 0, %s146
      %s150 = sphi 0, %s149
      %s166 = sphi 0, %s150
      %s174 = sphi 0, %s176
      %s177 = sphi 0, %s174
      %s178 = sphi 0, %s177
      %s194 = sphi 0, %s178
    $region4: #{tpu_custom_call.1} parent=1 // loop_header_branch
      %24 = sbr.rel (%p22) target = $region8
    $region5: #{tpu_custom_call.1} parent=1 // loop_body
      %s26 = ssub.s32 %s21, 1
      %s27 = ssub.s32 %s21, 2
      %s34 = sadd.s32 1, %s29
      %p35 = scmp.ge.s32.totalorder %s34, 2
      %s36 = scalar_select %p35, 0, %s34
      %s37 = sadd.s32 1, %s28
      %s38 = scalar_select %p35, %s37, %s28
      %p39 = scmp.ge.s32.totalorder %s38, 2
      %s40 = scalar_select %p39, 0, %s38
      %s41 = ssub.s32 %s28, %s40
      %p42 = scmp.eq.s32.totalorder %s41, 0
      %s44 = sadd.s32 %s43, 1
      %s45 = scalar_select %p42, %s43, %s44
      %p48 = pneg %p42
      %p49 = scmp.eq.s32.totalorder %s21, 3
      %p50 = por %p48, %p49
      %p51 = scmp.ne.s32.totalorder %s43, %s46
      %p52 = scmp.eq.s32.totalorder %s21, 0
      %p53 = por %p51, %p52
      %p54 = scmp.ne.s32.totalorder %s43, %s46
      %p55 = scmp.eq.s32.totalorder %s26, 3
      %p56 = por %p54, %p55
      %p57 = scmp.ne.s32.totalorder %s46, %s47
      %p58 = scmp.eq.s32.totalorder %s26, 0
      %p59 = por %p57, %p58
      %p60 = scmp.ne.s32.totalorder %s46, %s47
      %p61 = scmp.eq.s32.totalorder %s27, 3
      %p62 = por %p60, %p61
      %p64 = scmp.ne.s32.totalorder %s47, %s63
      %p65 = scmp.eq.s32.totalorder %s27, 0
      %p66 = por %p64, %p65
      %s67 = ssub.s32 %s28, %s40
      %s68 = ssub.s32 %s29, %s36
      %s69 = sor.u32 %s67, %s68
      %p70 = scmp.eq.s32.totalorder %s69, 0
      %s72 = sadd.s32 %s71, 1
      %s73 = scalar_select %p70, %s71, %s72
      %p76 = pneg %p70
      %p77 = scmp.eq.s32.totalorder %s21, 3
      %p78 = por %p76, %p77
      %p79 = scmp.ne.s32.totalorder %s71, %s74
      %p80 = scmp.eq.s32.totalorder %s21, 0
      %p81 = por %p79, %p80
      %p82 = scmp.ne.s32.totalorder %s71, %s74
      %p83 = scmp.eq.s32.totalorder %s26, 3
      %p84 = por %p82, %p83
      %p85 = scmp.ne.s32.totalorder %s74, %s75
      %p86 = scmp.eq.s32.totalorder %s26, 0
      %p87 = por %p85, %p86
      %p88 = scmp.ne.s32.totalorder %s74, %s75
      %p89 = scmp.eq.s32.totalorder %s27, 3
      %p90 = por %p88, %p89
      %p92 = scmp.ne.s32.totalorder %s75, %s91
      %p93 = scmp.eq.s32.totalorder %s27, 0
      %p94 = por %p92, %p93
      %s95 = ssub.s32 %s29, %s36
      %p96 = scmp.eq.s32.totalorder %s95, 0
      %s98 = sadd.s32 %s97, 1
      %s99 = scalar_select %p96, %s97, %s98
      %p102 = pneg %p96
      %p103 = scmp.eq.s32.totalorder %s21, 3
      %p104 = por %p102, %p103
      %p105 = scmp.ne.s32.totalorder %s97, %s100
      %p106 = scmp.eq.s32.totalorder %s21, 0
      %p107 = por %p105, %p106
      %p108 = scmp.ne.s32.totalorder %s97, %s100
      %p109 = scmp.eq.s32.totalorder %s26, 3
      %p110 = por %p108, %p109
      %p111 = scmp.ne.s32.totalorder %s100, %s101
      %p112 = scmp.eq.s32.totalorder %s26, 0
      %p113 = por %p111, %p112
      %p114 = scmp.ne.s32.totalorder %s100, %s101
      %p115 = scmp.eq.s32.totalorder %s27, 3
      %p116 = por %p114, %p115
      %p118 = scmp.ne.s32.totalorder %s101, %s117
      %p119 = scmp.eq.s32.totalorder %s27, 0
      %p120 = por %p118, %p119
      %s122 = sadd.s32 %s121, 1
      %p125 = scmp.eq.s32.totalorder %s21, 3
      %p126 = scmp.ne.s32.totalorder %s121, %s123
      %p127 = scmp.eq.s32.totalorder %s21, 0
      %p128 = por %p126, %p127
      %p129 = scmp.ne.s32.totalorder %s121, %s123
      %p130 = scmp.eq.s32.totalorder %s26, 3
      %p131 = por %p129, %p130
      %p132 = scmp.ne.s32.totalorder %s123, %s124
      %p133 = scmp.eq.s32.totalorder %s26, 0
      %p134 = por %p132, %p133
      %p135 = scmp.ne.s32.totalorder %s123, %s124
      %p136 = scmp.eq.s32.totalorder %s27, 3
      %p137 = por %p135, %p136
      %p139 = scmp.ne.s32.totalorder %s124, %s138
      %p140 = scmp.eq.s32.totalorder %s27, 0
      %p141 = por %p139, %p140
      %s142 = ssub.s32 %s28, %s40
      %s143 = ssub.s32 %s29, %s36
      %s144 = sor.u32 %s142, %s143
      %p145 = scmp.eq.s32.totalorder %s144, 0
      %s147 = sadd.s32 %s146, 1
      %s148 = scalar_select %p145, %s146, %s147
      %p151 = pneg %p145
      %p152 = scmp.eq.s32.totalorder %s21, 3
      %p153 = por %p151, %p152
      %p154 = scmp.ne.s32.totalorder %s146, %s149
      %p155 = scmp.eq.s32.totalorder %s21, 0
      %p156 = por %p154, %p155
      %p157 = scmp.ne.s32.totalorder %s146, %s149
      %p158 = scmp.eq.s32.totalorder %s26, 3
      %p159 = por %p157, %p158
      %p160 = scmp.ne.s32.totalorder %s149, %s150
      %p161 = scmp.eq.s32.totalorder %s26, 0
      %p162 = por %p160, %p161
      %p163 = scmp.ne.s32.totalorder %s149, %s150
      %p164 = scmp.eq.s32.totalorder %s27, 3
      %p165 = por %p163, %p164
      %p167 = scmp.ne.s32.totalorder %s150, %s166
      %p168 = scmp.eq.s32.totalorder %s27, 0
      %p169 = por %p167, %p168
      %s170 = ssub.s32 %s28, %s40
      %s171 = ssub.s32 %s29, %s36
      %s172 = sor.u32 %s170, %s171
      %p173 = scmp.eq.s32.totalorder %s172, 0
      %s175 = sadd.s32 %s174, 1
      %s176 = scalar_select %p173, %s174, %s175
      %p179 = pneg %p173
      %p180 = scmp.eq.s32.totalorder %s21, 3
      %p181 = por %p179, %p180
      %p182 = scmp.ne.s32.totalorder %s174, %s177
      %p183 = scmp.eq.s32.totalorder %s21, 0
      %p184 = por %p182, %p183
      %p185 = scmp.ne.s32.totalorder %s174, %s177
      %p186 = scmp.eq.s32.totalorder %s26, 3
      %p187 = por %p185, %p186
      %p188 = scmp.ne.s32.totalorder %s177, %s178
      %p189 = scmp.eq.s32.totalorder %s26, 0
      %p190 = por %p188, %p189
      %p191 = scmp.ne.s32.totalorder %s177, %s178
      %p192 = scmp.eq.s32.totalorder %s27, 3
      %p193 = por %p191, %p192
      %p195 = scmp.ne.s32.totalorder %s178, %s194
      %p196 = scmp.eq.s32.totalorder %s27, 0
      %p197 = por %p195, %p196
      %p198 = scmp.le.s32.totalorder 1, %s21
      %p199 = scmp.lt.s32.totalorder %s21, 5
      %p200 = pnand %p198, %p199
      %p201 = pneg %p200
      // Predicated region
      $region9: #{tpu_custom_call.1} parent=5 // pred_check
        _
      $region10: #{tpu_custom_call.1} parent=5 // pred_check_branch
        %203 = sbr.rel (%p200) target = $region12
      $region11: #{tpu_custom_call.1} parent=5 // pred_region
        %s204 = ssub.s32 %s21, 1
        // Predicated region
        $region13: #{tpu_custom_call.1} parent=11 // pred_check
          %p205 = pneg %p134
        $region14: #{tpu_custom_call.1} parent=11 // pred_check_branch
          %207 = sbr.rel (%p205) target = $region16
        $region15: #{tpu_custom_call.1} parent=11 // pred_region
          _
        $region16: #{tpu_custom_call.1} parent=11 // pred_fallthru
          _
      $region12: #{tpu_custom_call.1} parent=5 // pred_fallthru
        _
      %p208 = scmp.lt.s32.totalorder %s21, 4
      // Predicated region
      $region17: #{tpu_custom_call.1} parent=5 // pred_check
        %p209 = pneg %p208
      $region18: #{tpu_custom_call.1} parent=5 // pred_check_branch
        %211 = sbr.rel (%p209) target = $region20
      $region19: #{tpu_custom_call.1} parent=5 // pred_region
        // Predicated region
        $region21: #{tpu_custom_call.1} parent=19 // pred_check
          %p212 = pneg %p53
        $region22: #{tpu_custom_call.1} parent=19 // pred_check_branch
          %214 = sbr.rel (%p212) target = $region24
        $region23: #{tpu_custom_call.1} parent=19 // pred_region
          %p215 = scmp.lt.s32.totalorder %s28, 1
          %s216 = scalar_select %p215, %s28, 1
          %s217 = smul.addr %s216, 2
          %s218 = smul.addr %s217, 8
          %s219 = scalar_lea.vmem %s0, %s218
        $region24: #{tpu_custom_call.1} parent=19 // pred_fallthru
          _
        // Predicated region
        $region25: #{tpu_custom_call.1} parent=19 // pred_check
          %p220 = pneg %p81
        $region26: #{tpu_custom_call.1} parent=19 // pred_check_branch
          %222 = sbr.rel (%p220) target = $region28
        $region27: #{tpu_custom_call.1} parent=19 // pred_region
          #allocation9 [shape = 'u32[6]{0}', space=smem, size = 0x18, scoped, tag = 'DMA stride descriptor']
          %s223 = sand.u32 %s71, 1
          %s224 = scalar_lea.sflag [#allocation3], %s223
          %s225 = sand.u32 %s71, 1
          %s226 = smul.addr %s225, 128
          %s227 = scalar_lea.vmem [#allocation2], %s226
          %s228 = smul.u32 8, %s29
          %s230 = ssub.s32 2048, 2048
          %231 = vsyncadd %s224, %s230
          %s232 = smul.addr %s28, 32
          %s233 = sadd.s32 %s228, %s232
          %s234 = smul.addr %s233, 128
          %s235 = scalar_lea.hbm %s1, %s234
          %s237 = sshll.u32 1, 14
          %s238 = sxor.u32 4294967295, %s237
          %s240 = sld [smem:[#allocation0]]
          %s241 = sadd.s32 2, %s240
          %s243 = sshll.u32 7, 26
          %s244 = sxor.u32 4294967295, %s243
          %s245 = sand.u32 0, %s244
          %s246 = sshll.u32 %s241, 26
          %s247 = sor.u32 %s245, %s246
          %s248 = sshll.u32 %s227, 4
          %s249 = int_to_ptr.vmem [resolvable:$true] %s248
          %255 = sst [smem:[#allocation9]] 2048
          %s256 = scalar_lea.smem [#allocation9], 1
          %257 = sst [smem:[%s256]] 1024
          %s258 = scalar_lea.smem [#allocation9], 2
          %259 = sst [smem:[%s258]] 8
          %s260 = scalar_lea.smem [#allocation9], 3
          %261 = sst [smem:[%s260]] 128
          %s262 = scalar_lea.smem [#allocation9], 4
          %263 = sst [smem:[%s262]] 128
          %s264 = scalar_lea.smem [#allocation9], 5
          %265 = sst [smem:[%s264]] 8
          %267 = dma.general %s235, 2048, %s249, %s224, [#allocation8], [#allocation9], %s247, 0
        $region28: #{tpu_custom_call.1} parent=19 // pred_fallthru
          _
        // Predicated region
        $region29: #{tpu_custom_call.1} parent=19 // pred_check
          %p268 = pneg %p107
        $region30: #{tpu_custom_call.1} parent=19 // pred_check_branch
          %270 = sbr.rel (%p268) target = $region32
        $region31: #{tpu_custom_call.1} parent=19 // pred_region
          %s271 = smul.u32 8, %s29
          %p272 = scmp.lt.s32.totalorder %s271, 15
          %s273 = scalar_select %p272, %s271, 15
          %s274 = smul.addr %s273, 8
          %s275 = scalar_lea.vmem %s2, %s274
          %s276 = smul.u32 8, %s29
        $region32: #{tpu_custom_call.1} parent=19 // pred_fallthru
          _
      $region20: #{tpu_custom_call.1} parent=5 // pred_fallthru
        _
      %p277 = scmp.le.s32.totalorder 1, %s21
      %p278 = scmp.lt.s32.totalorder %s21, 5
      %p279 = pnand %p277, %p278
      %p280 = pneg %p279
      // Predicated region
      $region33: #{tpu_custom_call.1} parent=5 // pred_check
        _
      $region34: #{tpu_custom_call.1} parent=5 // pred_check_branch
        %282 = sbr.rel (%p279) target = $region36
      $region35: #{tpu_custom_call.1} parent=5 // pred_region
        %s283 = ssub.s32 %s21, 1
        %s284 = sand.u32 %s74, 1
        %s285 = scalar_lea.sflag [#allocation3], %s284
        %s286 = sand.u32 %s74, 1
        %s287 = smul.addr %s286, 128
        %s288 = scalar_lea.vmem [#allocation2], %s287
        // Predicated region
        $region37: #{tpu_custom_call.1} parent=35 // pred_check
          %p289 = pneg %p87
        $region38: #{tpu_custom_call.1} parent=35 // pred_check_branch
          %291 = sbr.rel (%p289) target = $region40
        $region39: #{tpu_custom_call.1} parent=35 // pred_region
          %292 = dma.done %s285, 2048
        $region40: #{tpu_custom_call.1} parent=35 // pred_fallthru
          _
        %p293 = scmp.lt.s32.totalorder %s30, 1
        %s294 = scalar_select %p293, %s30, 1
        %s295 = smul.addr %s294, 2
        %s296 = smul.addr %s295, 8
        %s297 = scalar_lea.vmem %s0, %s296
        %p298 = pneg %p59
        %p299 = pneg %p56
        %s300 = sand.u32 %s74, 1
        %s301 = scalar_lea.sflag [#allocation3], %s300
        %s302 = sand.u32 %s74, 1
        %s303 = smul.addr %s302, 128
        %s304 = scalar_lea.vmem [#allocation2], %s303
        %p305 = pneg %p87
        %p306 = pneg %p84
        %s307 = smul.u32 8, %s31
        %p308 = scmp.lt.s32.totalorder %s307, 15
        %s309 = scalar_select %p308, %s307, 15
        %s310 = smul.addr %s309, 8
        %s311 = scalar_lea.vmem %s2, %s310
        %p312 = pneg %p113
        %p313 = pneg %p110
        %p314 = pneg %p134
        %p315 = pneg %p131
        %p316 = pneg %p162
        %p317 = pneg %p159
        %s318 = sand.u32 %s149, 1
        %s319 = scalar_lea.sflag [#allocation4], %s318
        %s320 = sand.u32 %s149, 1
        %s321 = smul.addr %s320, 128
        %s322 = scalar_lea.vmem [#allocation5], %s321
        %p323 = pneg %p190
        %p324 = pneg %p187
        %s325 = sand.u32 %s177, 1
        %s326 = scalar_lea.sflag [#allocation7], %s325
        %s327 = sand.u32 %s177, 1
        %s328 = smul.addr %s327, 64
        %s329 = scalar_lea.vmem [#allocation6], %s328
        %p330 = scmp.lt.s32.totalorder %s30, 1
        %s331 = scalar_select %p330, %s30, 1
        %s332 = smul.addr %s331, 2
        %s333 = smul.addr %s332, 8
        %s334 = scalar_lea.vmem %s0, %s333
        %s335 = smul.u32 8, %s31
        %s336 = smul.u32 8, %s31
        %p337 = scmp.lt.s32.totalorder %s336, 15
        %s338 = scalar_select %p337, %s336, 15
        %s339 = smul.addr %s338, 8
        %s340 = scalar_lea.vmem %s2, %s339
        %s341 = smul.u32 8, %s31
        %s342 = smul.u32 8, %s31
        %s343 = smul.u32 8, %s31
        %v344 = vld [vmem:[%s334] sm:$0xff]
        %v345 = vld [vmem:[%s334 + $0x8] sm:$0xff]
        %v346 = vld [vmem:[%s340] sm:$0xff]
        %v347 = vld [vmem:[%s340 + $0x8] sm:$0xff]
        %v348 = vld [vmem:[%s340 + $0x10] sm:$0xff]
        %v349 = vld [vmem:[%s340 + $0x18] sm:$0xff]
        %v350 = vld [vmem:[%s340 + $0x20] sm:$0xff]
        %v351 = vld [vmem:[%s340 + $0x28] sm:$0xff]
        %v352 = vld [vmem:[%s340 + $0x30] sm:$0xff]
        %v353 = vld [vmem:[%s340 + $0x38] sm:$0xff]
        %v354 = vld [vmem:[%s3] sm:$0xff]
        %v355 = vld [vmem:[%s3 + $0x8] sm:$0xff]
        %vm356 = vcmask 130048
        %v358 = vsel %vm356, %v346, 0
        %v361 = vsel %vm356, %v347, 0
        %v364 = vsel %vm356, %v348, 0
        %v367 = vsel %vm356, %v349, 0
        %v370 = vsel %vm356, %v350, 0
        %v373 = vsel %vm356, %v351, 0
        %v376 = vsel %vm356, %v352, 0
        %v379 = vsel %vm356, %v353, 0
        %381 = vmatprep.subr.mxu0 0.0
        %382 = vmatpush1.msra.mxu0 %v344
        %383 = vmatprep.subr.mxu0 0.0
        %384 = vmatpush1.msra.mxu0 %v345
        %385 = vmatprep.subr.mxu0 0.0
        %386 = vmatpush1.msra.mxu0 0.0
        %387 = vmatprep.subr.mxu0 0.0
        %388 = vmatpush1.msra.mxu0 0.0
        %389 = vmatprep.subr.mxu0 0.0
        %390 = vmatpush1.msra.mxu0 0.0
        %391 = vmatprep.subr.mxu0 0.0
        %392 = vmatpush1.msra.mxu0 0.0
        %393 = vmatprep.subr.mxu0 0.0
        %394 = vmatpush1.msra.mxu0 0.0
        %395 = vmatprep.subr.mxu0 0.0
        %396 = vmatpush1.msra.mxu0 0.0
        %397 = vmatprep.subr.mxu0 0.0
        %398 = vmatpush1.msra.mxu0 0.0
        %399 = vmatprep.subr.mxu0 0.0
        %400 = vmatpush1.msra.mxu0 0.0
        %401 = vmatprep.subr.mxu0 0.0
        %402 = vmatpush1.msra.mxu0 0.0
        %403 = vmatprep.subr.mxu0 0.0
        %404 = vmatpush1.msra.mxu0 0.0
        %405 = vmatprep.subr.mxu0 0.0
        %406 = vmatpush1.msra.mxu0 0.0
        %407 = vmatprep.subr.mxu0 0.0
        %408 = vmatpush1.msra.mxu0 0.0
        %409 = vmatprep.subr.mxu0 0.0
        %410 = vmatpush1.msra.mxu0 0.0
        %411 = vmatprep.subr.mxu0 0.0
        %412 = vmatpush1.msra.mxu0 0.0
        %413 = vmatprep.subr.mxu0 0.0
        %414 = vmatpush1.msra.mxu0 0.0
        %415 = vmatprep.subr.mxu0 0.0
        %416 = vmatpush1.msra.mxu0 0.0
        %417 = vmatprep.subr.mxu0 0.0
        %418 = vmatpush1.msra.mxu0 0.0
        %419 = vmatprep.subr.mxu0 0.0
        %420 = vmatpush1.msra.mxu0 0.0
        %421 = vmatprep.subr.mxu0 0.0
        %422 = vmatpush1.msra.mxu0 0.0
        %423 = vmatprep.subr.mxu0 0.0
        %424 = vmatpush1.msra.mxu0 0.0
        %425 = vmatprep.subr.mxu0 0.0
        %426 = vmatpush1.msra.mxu0 0.0
        %427 = vmatprep.subr.mxu0 0.0
        %428 = vmatpush1.msra.mxu0 0.0
        %429 = vmatprep.subr.mxu0 0.0
        %430 = vmatpush1.msra.mxu0 0.0
        %431 = vmatprep.subr.mxu0 0.0
        %432 = vmatpush1.msra.mxu0 0.0
        %433 = vmatprep.subr.mxu0 0.0
        %434 = vmatpush1.msra.mxu0 0.0
        %435 = vmatprep.subr.mxu0 0.0
        %436 = vmatpush1.msra.mxu0 0.0
        %437 = vmatprep.subr.mxu0 0.0
        %438 = vmatpush1.msra.mxu0 0.0
        %439 = vmatprep.subr.mxu0 0.0
        %440 = vmatpush1.msra.mxu0 0.0
        %441 = vmatprep.subr.mxu0 0.0
        %442 = vmatpush1.msra.mxu0 0.0
        %443 = vmatprep.subr.mxu0 0.0
        %444 = vmatpush1.msra.mxu0 0.0
        %445 = vmatprep.mubr.f32.mxu0 0.0
        %446 = vmatmul.mubr.f32.gmra.mrb[0].mxu0 %v358
        %v447 = vpop.f32.mrb[0].mxu0
        %v448 = vadd.f32 0.0, %v447
        %v449 = vpop.f32.mrb[0].mxu0
        %450 = vmatprep.mubr.f32.mxu0 0.0
        %451 = vmatmul.mubr.f32.gmra.mrb[0].mxu0 %v361
        %v452 = vpop.f32.mrb[0].mxu0
        %v453 = vadd.f32 0.0, %v452
        %v454 = vpop.f32.mrb[0].mxu0
        %455 = vmatprep.mubr.f32.mxu0 0.0
        %456 = vmatmul.mubr.f32.gmra.mrb[0].mxu0 %v364
        %v457 = vpop.f32.mrb[0].mxu0
        %v458 = vadd.f32 0.0, %v457
        %v459 = vpop.f32.mrb[0].mxu0
        %460 = vmatprep.mubr.f32.mxu0 0.0
        %461 = vmatmul.mubr.f32.gmra.mrb[0].mxu0 %v367
        %v462 = vpop.f32.mrb[0].mxu0
        %v463 = vadd.f32 0.0, %v462
        %v464 = vpop.f32.mrb[0].mxu0
        %465 = vmatprep.mubr.f32.mxu0 0.0
        %466 = vmatmul.mubr.f32.gmra.mrb[0].mxu0 %v370
        %v467 = vpop.f32.mrb[0].mxu0
        %v468 = vadd.f32 0.0, %v467
        %v469 = vpop.f32.mrb[0].mxu0
        %470 = vmatprep.mubr.f32.mxu0 0.0
        %471 = vmatmul.mubr.f32.gmra.mrb[0].mxu0 %v373
        %v472 = vpop.f32.mrb[0].mxu0
        %v473 = vadd.f32 0.0, %v472
        %v474 = vpop.f32.mrb[0].mxu0
        %475 = vmatprep.mubr.f32.mxu0 0.0
        %476 = vmatmul.mubr.f32.gmra.mrb[0].mxu0 %v376
        %v477 = vpop.f32.mrb[0].mxu0
        %v478 = vadd.f32 0.0, %v477
        %v479 = vpop.f32.mrb[0].mxu0
        %480 = vmatprep.mubr.f32.mxu0 0.0
        %481 = vmatmul.mubr.f32.gmra.mrb[0].mxu0 %v379
        %v482 = vpop.f32.mrb[0].mxu0
        %v483 = vadd.f32 0.0, %v482
        %v484 = vpop.f32.mrb[0].mxu0
        %485 = vdwg.mxu0
        %v487 = vsel %vm356, %v448, 0
        %v490 = vsel %vm356, %v453, 0
        %v493 = vsel %vm356, %v458, 0
        %v496 = vsel %vm356, %v463, 0
        %v499 = vsel %vm356, %v468, 0
        %v502 = vsel %vm356, %v473, 0
        %v505 = vsel %vm356, %v478, 0
        %v508 = vsel %vm356, %v483, 0
        %510 = vmatprep.subr.mxu0 0.0
        %511 = vmatpush1.msra.mxu0 %v354
        %512 = vmatprep.subr.mxu0 0.0
        %513 = vmatpush1.msra.mxu0 %v355
        %514 = vmatprep.subr.mxu0 0.0
        %515 = vmatpush1.msra.mxu0 0.0
        %516 = vmatprep.subr.mxu0 0.0
        %517 = vmatpush1.msra.mxu0 0.0
        %518 = vmatprep.subr.mxu0 0.0
        %519 = vmatpush1.msra.mxu0 0.0
        %520 = vmatprep.subr.mxu0 0.0
        %521 = vmatpush1.msra.mxu0 0.0
        %522 = vmatprep.subr.mxu0 0.0
        %523 = vmatpush1.msra.mxu0 0.0
        %524 = vmatprep.subr.mxu0 0.0
        %525 = vmatpush1.msra.mxu0 0.0
        %526 = vmatprep.subr.mxu0 0.0
        %527 = vmatpush1.msra.mxu0 0.0
        %528 = vmatprep.subr.mxu0 0.0
        %529 = vmatpush1.msra.mxu0 0.0
        %530 = vmatprep.subr.mxu0 0.0
        %531 = vmatpush1.msra.mxu0 0.0
        %532 = vmatprep.subr.mxu0 0.0
        %533 = vmatpush1.msra.mxu0 0.0
        %534 = vmatprep.subr.mxu0 0.0
        %535 = vmatpush1.msra.mxu0 0.0
        %536 = vmatprep.subr.mxu0 0.0
        %537 = vmatpush1.msra.mxu0 0.0
        %538 = vmatprep.subr.mxu0 0.0
        %539 = vmatpush1.msra.mxu0 0.0
        %540 = vmatprep.subr.mxu0 0.0
        %541 = vmatpush1.msra.mxu0 0.0
        %542 = vmatprep.subr.mxu0 0.0
        %543 = vmatpush1.msra.mxu0 0.0
        %544 = vmatprep.subr.mxu0 0.0
        %545 = vmatpush1.msra.mxu0 0.0
        %546 = vmatprep.subr.mxu0 0.0
        %547 = vmatpush1.msra.mxu0 0.0
        %548 = vmatprep.subr.mxu0 0.0
        %549 = vmatpush1.msra.mxu0 0.0
        %550 = vmatprep.subr.mxu0 0.0
        %551 = vmatpush1.msra.mxu0 0.0
        %552 = vmatprep.subr.mxu0 0.0
        %553 = vmatpush1.msra.mxu0 0.0
        %554 = vmatprep.subr.mxu0 0.0
        %555 = vmatpush1.msra.mxu0 0.0
        %556 = vmatprep.subr.mxu0 0.0
        %557 = vmatpush1.msra.mxu0 0.0
        %558 = vmatprep.subr.mxu0 0.0
        %559 = vmatpush1.msra.mxu0 0.0
        %560 = vmatprep.subr.mxu0 0.0
        %561 = vmatpush1.msra.mxu0 0.0
        %562 = vmatprep.subr.mxu0 0.0
        %563 = vmatpush1.msra.mxu0 0.0
        %564 = vmatprep.subr.mxu0 0.0
        %565 = vmatpush1.msra.mxu0 0.0
        %566 = vmatprep.subr.mxu0 0.0
        %567 = vmatpush1.msra.mxu0 0.0
        %568 = vmatprep.subr.mxu0 0.0
        %569 = vmatpush1.msra.mxu0 0.0
        %570 = vmatprep.subr.mxu0 0.0
        %571 = vmatpush1.msra.mxu0 0.0
        %572 = vmatprep.subr.mxu0 0.0
        %573 = vmatpush1.msra.mxu0 0.0
        %574 = vmatprep.mubr.f32.mxu0 0.0
        %575 = vmatmul.mubr.f32.gmra.mrb[0].mxu0 %v487
        %v576 = vpop.f32.mrb[0].mxu0
        %v577 = vadd.f32 0.0, %v576
        %v578 = vpop.f32.mrb[0].mxu0
        %579 = vmatprep.mubr.f32.mxu0 0.0
        %580 = vmatmul.mubr.f32.gmra.mrb[0].mxu0 %v490
        %v581 = vpop.f32.mrb[0].mxu0
        %v582 = vadd.f32 0.0, %v581
        %v583 = vpop.f32.mrb[0].mxu0
        %584 = vmatprep.mubr.f32.mxu0 0.0
        %585 = vmatmul.mubr.f32.gmra.mrb[0].mxu0 %v493
        %v586 = vpop.f32.mrb[0].mxu0
        %v587 = vadd.f32 0.0, %v586
        %v588 = vpop.f32.mrb[0].mxu0
        %589 = vmatprep.mubr.f32.mxu0 0.0
        %590 = vmatmul.mubr.f32.gmra.mrb[0].mxu0 %v496
        %v591 = vpop.f32.mrb[0].mxu0
        %v592 = vadd.f32 0.0, %v591
        %v593 = vpop.f32.mrb[0].mxu0
        %594 = vmatprep.mubr.f32.mxu0 0.0
        %595 = vmatmul.mubr.f32.gmra.mrb[0].mxu0 %v499
        %v596 = vpop.f32.mrb[0].mxu0
        %v597 = vadd.f32 0.0, %v596
        %v598 = vpop.f32.mrb[0].mxu0
        %599 = vmatprep.mubr.f32.mxu0 0.0
        %600 = vmatmul.mubr.f32.gmra.mrb[0].mxu0 %v502
        %v601 = vpop.f32.mrb[0].mxu0
        %v602 = vadd.f32 0.0, %v601
        %v603 = vpop.f32.mrb[0].mxu0
        %604 = vmatprep.mubr.f32.mxu0 0.0
        %605 = vmatmul.mubr.f32.gmra.mrb[0].mxu0 %v505
        %v606 = vpop.f32.mrb[0].mxu0
        %v607 = vadd.f32 0.0, %v606
        %v608 = vpop.f32.mrb[0].mxu0
        %609 = vmatprep.mubr.f32.mxu0 0.0
        %610 = vmatmul.mubr.f32.gmra.mrb[0].mxu0 %v508
        %v611 = vpop.f32.mrb[0].mxu0
        %v612 = vadd.f32 0.0, %v611
        %v613 = vpop.f32.mrb[0].mxu0
        %614 = vdwg.mxu0
        %615 = vst [vmem:[%s329] sm:$0xff] %v577
        %616 = vst [vmem:[%s329 + $0x8] sm:$0xff] %v582
        %617 = vst [vmem:[%s329 + $0x10] sm:$0xff] %v587
        %618 = vst [vmem:[%s329 + $0x18] sm:$0xff] %v592
        %619 = vst [vmem:[%s329 + $0x20] sm:$0xff] %v597
        %620 = vst [vmem:[%s329 + $0x28] sm:$0xff] %v602
        %621 = vst [vmem:[%s329 + $0x30] sm:$0xff] %v607
        %622 = vst [vmem:[%s329 + $0x38] sm:$0xff] %v612
        %v623 = vxor.u32 %v577, 2147483648
        %v624 = vxor.u32 %v582, 2147483648
        %v625 = vxor.u32 %v587, 2147483648
        %v626 = vxor.u32 %v592, 2147483648
        %v627 = vxor.u32 %v597, 2147483648
        %v628 = vxor.u32 %v602, 2147483648
        %v629 = vxor.u32 %v607, 2147483648
        %v630 = vxor.u32 %v612, 2147483648
        %v631 = vmul.f32 %v623, 1.442695
        %v632 = vpow.pop %v631
        %v633 = vmul.f32 %v624, 1.442695
        %v634 = vpow.pop %v633
        %v635 = vmul.f32 %v625, 1.442695
        %v636 = vpow.pop %v635
        %v637 = vmul.f32 %v626, 1.442695
        %v638 = vpow.pop %v637
        %v639 = vmul.f32 %v627, 1.442695
        %v640 = vpow.pop %v639
        %v641 = vmul.f32 %v628, 1.442695
        %v642 = vpow.pop %v641
        %v643 = vmul.f32 %v629, 1.442695
        %v644 = vpow.pop %v643
        %v645 = vmul.f32 %v630, 1.442695
        %v646 = vpow.pop %v645
        %v647 = vadd.f32 %v632, 1.0
        %v648 = vadd.f32 %v634, 1.0
        %v649 = vadd.f32 %v636, 1.0
        %v650 = vadd.f32 %v638, 1.0
        %v651 = vadd.f32 %v640, 1.0
        %v652 = vadd.f32 %v642, 1.0
        %v653 = vadd.f32 %v644, 1.0
        %v654 = vadd.f32 %v646, 1.0
        %v655 = vrcp.pop %v647
        %v656 = vmul.f32 1.0, %v655
        %v657 = vrcp.pop %v648
        %v658 = vmul.f32 1.0, %v657
        %v659 = vrcp.pop %v649
        %v660 = vmul.f32 1.0, %v659
        %v661 = vrcp.pop %v650
        %v662 = vmul.f32 1.0, %v661
        %v663 = vrcp.pop %v651
        %v664 = vmul.f32 1.0, %v663
        %v665 = vrcp.pop %v652
        %v666 = vmul.f32 1.0, %v665
        %v667 = vrcp.pop %v653
        %v668 = vmul.f32 1.0, %v667
        %v669 = vrcp.pop %v654
        %v670 = vmul.f32 1.0, %v669
        %v671 = vld [vmem:[%s288] sm:$0xff]
        %v672 = vld [vmem:[%s288 + $0x8] sm:$0xff]
        %v673 = vld [vmem:[%s288 + $0x10] sm:$0xff]
        %v674 = vld [vmem:[%s288 + $0x18] sm:$0xff]
        %v675 = vld [vmem:[%s288 + $0x20] sm:$0xff]
        %v676 = vld [vmem:[%s288 + $0x28] sm:$0xff]
        %v677 = vld [vmem:[%s288 + $0x30] sm:$0xff]
        %v678 = vld [vmem:[%s288 + $0x38] sm:$0xff]
        %s679 = scalar_lea.vmem %s288, 64 [#allocation2]
        %v680 = vld [vmem:[%s679] sm:$0xff]
        %v681 = vld [vmem:[%s679 + $0x8] sm:$0xff]
        %v682 = vld [vmem:[%s679 + $0x10] sm:$0xff]
        %v683 = vld [vmem:[%s679 + $0x18] sm:$0xff]
        %v684 = vld [vmem:[%s679 + $0x20] sm:$0xff]
        %v685 = vld [vmem:[%s679 + $0x28] sm:$0xff]
        %v686 = vld [vmem:[%s679 + $0x30] sm:$0xff]
        %v687 = vld [vmem:[%s679 + $0x38] sm:$0xff]
        %v688 = vsub.f32 %v680, %v671
        %v689 = vsub.f32 %v681, %v672
        %v690 = vsub.f32 %v682, %v673
        %v691 = vsub.f32 %v683, %v674
        %v692 = vsub.f32 %v684, %v675
        %v693 = vsub.f32 %v685, %v676
        %v694 = vsub.f32 %v686, %v677
        %v695 = vsub.f32 %v687, %v678
        %v696 = vxor.u32 %v688, 2147483648
        %v697 = vxor.u32 %v689, 2147483648
        %v698 = vxor.u32 %v690, 2147483648
        %v699 = vxor.u32 %v691, 2147483648
        %v700 = vxor.u32 %v692, 2147483648
        %v701 = vxor.u32 %v693, 2147483648
        %v702 = vxor.u32 %v694, 2147483648
        %v703 = vxor.u32 %v695, 2147483648
        %v704 = vmul.f32 %v696, 1.442695
        %v705 = vpow.pop %v704
        %v706 = vmul.f32 %v697, 1.442695
        %v707 = vpow.pop %v706
        %v708 = vmul.f32 %v698, 1.442695
        %v709 = vpow.pop %v708
        %v710 = vmul.f32 %v699, 1.442695
        %v711 = vpow.pop %v710
        %v712 = vmul.f32 %v700, 1.442695
        %v713 = vpow.pop %v712
        %v714 = vmul.f32 %v701, 1.442695
        %v715 = vpow.pop %v714
        %v716 = vmul.f32 %v702, 1.442695
        %v717 = vpow.pop %v716
        %v718 = vmul.f32 %v703, 1.442695
        %v719 = vpow.pop %v718
        %v720 = vadd.f32 %v705, 1.0
        %v721 = vadd.f32 %v707, 1.0
        %v722 = vadd.f32 %v709, 1.0
        %v723 = vadd.f32 %v711, 1.0
        %v724 = vadd.f32 %v713, 1.0
        %v725 = vadd.f32 %v715, 1.0
        %v726 = vadd.f32 %v717, 1.0
        %v727 = vadd.f32 %v719, 1.0
        %v728 = vrcp.pop %v720
        %v729 = vmul.f32 1.0, %v728
        %v730 = vrcp.pop %v721
        %v731 = vmul.f32 1.0, %v730
        %v732 = vrcp.pop %v722
        %v733 = vmul.f32 1.0, %v732
        %v734 = vrcp.pop %v723
        %v735 = vmul.f32 1.0, %v734
        %v736 = vrcp.pop %v724
        %v737 = vmul.f32 1.0, %v736
        %v738 = vrcp.pop %v725
        %v739 = vmul.f32 1.0, %v738
        %v740 = vrcp.pop %v726
        %v741 = vmul.f32 1.0, %v740
        %v742 = vrcp.pop %v727
        %v743 = vmul.f32 1.0, %v742
        %v744 = vmul.f32 %v656, 0.4
        %v745 = vmul.f32 %v658, 0.4
        %v746 = vmul.f32 %v660, 0.4
        %v747 = vmul.f32 %v662, 0.4
        %v748 = vmul.f32 %v664, 0.4
        %v749 = vmul.f32 %v666, 0.4
        %v750 = vmul.f32 %v668, 0.4
        %v751 = vmul.f32 %v670, 0.4
        %v752 = vmul.f32 %v729, 0.6
        %v753 = vmul.f32 %v731, 0.6
        %v754 = vmul.f32 %v733, 0.6
        %v755 = vmul.f32 %v735, 0.6
        %v756 = vmul.f32 %v737, 0.6
        %v757 = vmul.f32 %v739, 0.6
        %v758 = vmul.f32 %v741, 0.6
        %v759 = vmul.f32 %v743, 0.6
        %v760 = vadd.f32 %v744, %v752
        %v761 = vadd.f32 %v745, %v753
        %v762 = vadd.f32 %v746, %v754
        %v763 = vadd.f32 %v747, %v755
        %v764 = vadd.f32 %v748, %v756
        %v765 = vadd.f32 %v749, %v757
        %v766 = vadd.f32 %v750, %v758
        %v767 = vadd.f32 %v751, %v759
        %s768 = scalar_lea.vmem %s322, 64 [#allocation5]
        %769 = vst [vmem:[%s768] sm:$0xff] %v760
        %770 = vst [vmem:[%s768 + $0x8] sm:$0xff] %v761
        %771 = vst [vmem:[%s768 + $0x10] sm:$0xff] %v762
        %772 = vst [vmem:[%s768 + $0x18] sm:$0xff] %v763
        %773 = vst [vmem:[%s768 + $0x20] sm:$0xff] %v764
        %774 = vst [vmem:[%s768 + $0x28] sm:$0xff] %v765
        %775 = vst [vmem:[%s768 + $0x30] sm:$0xff] %v766
        %776 = vst [vmem:[%s768 + $0x38] sm:$0xff] %v767
        %v777 = vsub.f32 1.0, %v760
        %v778 = vsub.f32 1.0, %v761
        %v779 = vsub.f32 1.0, %v762
        %v780 = vsub.f32 1.0, %v763
        %v781 = vsub.f32 1.0, %v764
        %v782 = vsub.f32 1.0, %v765
        %v783 = vsub.f32 1.0, %v766
        %v784 = vsub.f32 1.0, %v767
        %785 = vst [vmem:[%s322] sm:$0xff] %v777
        %786 = vst [vmem:[%s322 + $0x8] sm:$0xff] %v778
        %787 = vst [vmem:[%s322 + $0x10] sm:$0xff] %v779
        %788 = vst [vmem:[%s322 + $0x18] sm:$0xff] %v780
        %789 = vst [vmem:[%s322 + $0x20] sm:$0xff] %v781
        %790 = vst [vmem:[%s322 + $0x28] sm:$0xff] %v782
        %791 = vst [vmem:[%s322 + $0x30] sm:$0xff] %v783
        %792 = vst [vmem:[%s322 + $0x38] sm:$0xff] %v784
        %s793 = sand.u32 %s149, 1
        %s794 = scalar_lea.sflag [#allocation4], %s793
        %s795 = sand.u32 %s149, 1
        %s796 = smul.addr %s795, 128
        %s797 = scalar_lea.vmem [#allocation5], %s796
        %s798 = sand.u32 %s177, 1
        %s799 = scalar_lea.sflag [#allocation7], %s798
        %s800 = sand.u32 %s177, 1
        %s801 = smul.addr %s800, 64
        %s802 = scalar_lea.vmem [#allocation6], %s801
        // Predicated region
        $region41: #{tpu_custom_call.1} parent=35 // pred_check
          %p803 = pneg %p159
        $region42: #{tpu_custom_call.1} parent=35 // pred_check_branch
          %805 = sbr.rel (%p803) target = $region44
        $region43: #{tpu_custom_call.1} parent=35 // pred_region
          #allocation11 [shape = 'u32[6]{0}', space=smem, size = 0x18, scoped, tag = 'DMA stride descriptor']
          %s806 = smul.u32 8, %s31
          %s808 = ssub.s32 2048, 2048
          %809 = vsyncadd %s794, %s808
          %s810 = smul.addr %s30, 32
          %s811 = sadd.s32 %s806, %s810
          %s812 = smul.addr %s811, 128
          %s813 = scalar_lea.hbm %s4, %s812
          %s815 = sshll.u32 1, 14
          %s816 = sxor.u32 4294967295, %s815
          %s819 = sshll.u32 7, 18
          %s820 = sxor.u32 4294967295, %s819
          %s821 = sand.u32 0, %s820
          %s823 = sor.u32 %s821, 0
          %s825 = sshll.u32 3, 24
          %s826 = sxor.u32 4294967295, %s825
          %s827 = sand.u32 %s823, %s826
          %s829 = sor.u32 %s827, 0
          %s830 = sshll.u32 %s797, 4
          %s831 = int_to_ptr.vmem [resolvable:$true] %s830
          %837 = sst [smem:[#allocation11]] 1024
          %s838 = scalar_lea.smem [#allocation11], 1
          %839 = sst [smem:[%s838]] 2048
          %s840 = scalar_lea.smem [#allocation11], 2
          %841 = sst [smem:[%s840]] 8
          %s842 = scalar_lea.smem [#allocation11], 3
          %843 = sst [smem:[%s842]] 128
          %s844 = scalar_lea.smem [#allocation11], 4
          %845 = sst [smem:[%s844]] 128
          %s846 = scalar_lea.smem [#allocation11], 5
          %847 = sst [smem:[%s846]] 8
          %849 = dma.general %s831, 2048, %s813, %s794, [#allocation10], [#allocation11], %s829, 0
        $region44: #{tpu_custom_call.1} parent=35 // pred_fallthru
          _
        // Predicated region
        $region45: #{tpu_custom_call.1} parent=35 // pred_check
          %p850 = pneg %p187
        $region46: #{tpu_custom_call.1} parent=35 // pred_check_branch
          %852 = sbr.rel (%p850) target = $region48
        $region47: #{tpu_custom_call.1} parent=35 // pred_region
          %s853 = smul.u32 8, %s31
          %s855 = ssub.s32 1024, 1024
          %856 = vsyncadd %s799, %s855
          %s857 = smul.addr %s30, 16
          %s858 = sadd.s32 %s853, %s857
          %s859 = smul.addr %s858, 128
          %s860 = scalar_lea.hbm %s5, %s859
          %s861 = sshll.u32 %s802, 4
          %s862 = int_to_ptr.vmem [resolvable:$true] %s861
          %867 = dma.vmem_to_hbm [thread:$0]  %s862, 1024, %s860, %s799, 128, 128, 8
        $region48: #{tpu_custom_call.1} parent=35 // pred_fallthru
          _
      $region36: #{tpu_custom_call.1} parent=5 // pred_fallthru
        _
      %p868 = scmp.le.s32.totalorder 2, %s21
      // Predicated region
      $region49: #{tpu_custom_call.1} parent=5 // pred_check
        %p869 = pneg %p868
      $region50: #{tpu_custom_call.1} parent=5 // pred_check_branch
        %871 = sbr.rel (%p869) target = $region52
      $region51: #{tpu_custom_call.1} parent=5 // pred_region
        %s872 = ssub.s32 %s21, 2
        // Predicated region
        $region53: #{tpu_custom_call.1} parent=51 // pred_check
          %p873 = pneg %p165
        $region54: #{tpu_custom_call.1} parent=51 // pred_check_branch
          %875 = sbr.rel (%p873) target = $region56
        $region55: #{tpu_custom_call.1} parent=51 // pred_region
          %s876 = sand.u32 %s150, 1
          %s877 = scalar_lea.sflag [#allocation4], %s876
          %s878 = sand.u32 %s150, 1
          %s879 = smul.addr %s878, 128
          %s880 = scalar_lea.vmem [#allocation5], %s879
          %881 = dma.done %s877, 2048
        $region56: #{tpu_custom_call.1} parent=51 // pred_fallthru
          _
        // Predicated region
        $region57: #{tpu_custom_call.1} parent=51 // pred_check
          %p882 = pneg %p193
        $region58: #{tpu_custom_call.1} parent=51 // pred_check_branch
          %884 = sbr.rel (%p882) target = $region60
        $region59: #{tpu_custom_call.1} parent=51 // pred_region
          %s885 = sand.u32 %s178, 1
          %s886 = scalar_lea.sflag [#allocation7], %s885
          %s887 = sand.u32 %s178, 1
          %s888 = smul.addr %s887, 64
          %s889 = scalar_lea.vmem [#allocation6], %s888
          %890 = dma.done %s886, 1024
        $region60: #{tpu_custom_call.1} parent=51 // pred_fallthru
          _
      $region52: #{tpu_custom_call.1} parent=5 // pred_fallthru
        _
    $region6: #{tpu_custom_call.1} parent=1 // loop_footer
      %s25 = sadd.s32 1, %s21
    $region7: #{tpu_custom_call.1} parent=1 // loop_footer_branch
      %20 = sbr.rel target = $region3
    $region8: #{tpu_custom_call.1} parent=1 // loop_exit
      _
    %891 = vsyncpa [#allocation3], 1
    %s892 = scalar_lea.sflag [#allocation3], 1
    %893 = vsyncpa %s892, 1
    %894 = vsyncpa [#allocation4], 1
    %s895 = scalar_lea.sflag [#allocation4], 1
    %896 = vsyncpa %s895, 1
    %897 = vsyncpa [#allocation7], 1
    %s898 = scalar_lea.sflag [#allocation7], 1
    %899 = vsyncpa %s898, 1

</llo_original>
